<compile_context>
chip_gen: v7x
topology: tpu7x:2x2x1
jax: 0.10.0
libtpu: 0.0.40
codegen_flags: <defaults>
</compile_context>

<pallas_src>
import functools
import math
from typing import NamedTuple, Optional

import jax
import jax.numpy as jnp
from jax.experimental import pallas as pl
from jax.experimental.pallas import tpu as pltpu


_TRANSCENDENTAL_ACTIVS = ("tanh", "sigmoid", "gelu")


def _round_up(x, m):
    return ((x + m - 1) // m) * m


def _cdiv(a, b):
    return (a + b - 1) // b


def _sublane_multiple(dtype):
    # 8 rows/vreg for 32-bit, 16 for bf16, 32 for int8/fp8.
    itemsize = jnp.dtype(dtype).itemsize
    return 8 * max(1, 4 // max(itemsize, 1))


def _largest_divisor(n, candidates):
    for c in candidates:
        if c <= n and n % c == 0:
            return c
    return 128


def _vmem_capacity_bytes():
    try:
        cap = int(pltpu.get_tpu_info().vmem_capacity_bytes)
        if cap > 0:
            return cap
    except Exception:
        pass
    return 64 << 20  # conservative: v7x per-TensorCore VMEM


def _apply_activ(acc, activ, gelu_approx):
    # Epilogue runs in float32 (important on v5e: no bf16 VPU/EUP path).
    if activ == "linear":
        return acc
    if activ == "tanh":
        return jnp.tanh(acc)
    if activ == "relu":
        return jnp.maximum(acc, 0.0)
    if activ == "sigmoid":
        return jax.nn.sigmoid(acc)
    if activ == "gelu":
        # PyTorch nn.GELU default is the exact erf form (gelu_approx=False).
        return jax.nn.gelu(acc, approximate=gelu_approx)
    # TODO(synk): original module looks up arbitrary names in torch /
    # torch.nn.functional; only the activations above are supported here.
    raise ValueError(f"unsupported activ: {activ}")


# ----------------------------------------------------------------------------
# Mode A kernel: weight fully VMEM-resident, 1-D grid over M row-panels.
#   x_ref : (tm, k_pad)     row panel (resident per i)
#   wt_ref: (k_pad, n_pad)  whole pre-transposed weight (DMA'd once)
#   b_ref : (1, n_pad)      bias (only when use_bias)
#   o_ref : (tm, n_pad)     output panel
# ----------------------------------------------------------------------------
def _ff_kernel_resident(x_ref, wt_ref, *rest, activ, use_bias, gelu_approx):
    if use_bias:
        b_ref, o_ref = rest
    else:
        (o_ref,) = rest
        b_ref = None
    acc = jnp.dot(x_ref[...], wt_ref[...], preferred_element_type=jnp.float32)
    if use_bias:
        acc = acc + b_ref[...].astype(jnp.float32)
    o_ref[...] = _apply_activ(acc, activ, gelu_approx).astype(o_ref.dtype)


# ----------------------------------------------------------------------------
# Mode B kernel: classic (M, N, K) streamed tiles with f32 accumulation.
# When the output dtype is f32 we accumulate directly into o_ref (no scratch).
# ----------------------------------------------------------------------------
def _ff_kernel_stream(x_ref, wt_ref, *rest, activ, use_bias, acc_in_out,
                      gelu_approx):
    idx = 0
    b_ref = None
    if use_bias:
        b_ref = rest[idx]
        idx += 1
    o_ref = rest[idx]
    idx += 1
    acc_ref = o_ref if acc_in_out else rest[idx]

    k = pl.program_id(2)

    @pl.when(k == 0)
    def _():
        acc_ref[...] = jnp.zeros_like(acc_ref)

    acc_ref[...] += jnp.dot(
        x_ref[...], wt_ref[...], preferred_element_type=jnp.float32
    )

    @pl.when(k == pl.num_programs(2) - 1)
    def _():
        acc = acc_ref[...]
        if use_bias:
            acc = acc + b_ref[...].astype(jnp.float32)
        o_ref[...] = _apply_activ(acc, activ, gelu_approx).astype(o_ref.dtype)


# ----------------------------------------------------------------------------
# One-time parameter preparation (hoisted out of the per-call path)
# ----------------------------------------------------------------------------
class FFParams(NamedTuple):
    wt: jax.Array                 # (k_pad, n_pad) pre-transposed, padded weight
    bias: Optional[jax.Array]     # (1, n_pad) float32 padded bias, or None
    input_size: int
    hidden_size: int


def prepare_ff_params(weight, bias=None, *, compute_dtype=jnp.bfloat16):
    """Transpose W -> W^T, pad to lane-aligned (multiple-of-128) dims, cast.

    bf16 is the default MXU input dtype (native peak path on v5e/v6e/v7x);
    the in-kernel accumulator and epilogue stay float32.  Pass
    compute_dtype=jnp.float32 to opt out.
    """
    hidden_size, input_size = weight.shape
    k_pad = _round_up(input_size, 128)
    n_pad = _round_up(hidden_size, 128)

    wt = jnp.transpose(weight).astype(compute_dtype)       # (K, N)
    if (k_pad, n_pad) != (input_size, hidden_size):
        wt = jnp.pad(wt, ((0, k_pad - input_size), (0, n_pad - hidden_size)))

    b2d = None
    if bias is not None:
        b2d = bias.astype(jnp.float32)
        if n_pad != hidden_size:
            b2d = jnp.pad(b2d, (0, n_pad - hidden_size))
        b2d = b2d.reshape(1, n_pad)

    return FFParams(wt=wt, bias=b2d, input_size=input_size,
                    hidden_size=hidden_size)


# ----------------------------------------------------------------------------
# Forward pass
# ----------------------------------------------------------------------------
def ff_forward(x, params: FFParams, activ=None, *,
               tm_default=512, tn_default=512, tk_default=1024,
               gelu_approx=False, max_resident_weight_bytes=None):
    """Pallas implementation of FF.forward.

    Args:
      x:      (..., input_size) array.
      params: FFParams from `prepare_ff_params`.
      activ:  None / 'linear' / 'tanh' / 'relu' / 'sigmoid' / 'gelu'.
    Returns:
      (..., hidden_size) array, same dtype as x.
    """
    activ = "linear" if activ in (None, "linear") else activ
    input_size, hidden_size = params.input_size, params.hidden_size
    lead_shape = x.shape[:-1]
    assert x.shape[-1] == input_size
    out_dtype = x.dtype

    m = int(math.prod(lead_shape)) if lead_shape else 1
    if m == 0:
        return jnp.zeros((*lead_shape, hidden_size), out_dtype)

    k_pad, n_pad = params.wt.shape
    cdt = params.wt.dtype
    x_isz = jnp.dtype(cdt).itemsize
    w_isz = x_isz
    out_isz = jnp.dtype(out_dtype).itemsize
    sub = _sublane_multiple(cdt)
    vmem_cap = _vmem_capacity_bytes()

    # --- M tiling: balanced (bounds zero-row padding to < 1 tile), sublane
    # aligned, and >=2 tiles when possible so v7x megacore gets both cores.
    num_m = max(1, _cdiv(m, tm_default))
    if num_m == 1 and m >= 2 * sub:
        num_m = 2
    tm = _round_up(_cdiv(m, num_m), sub)
    num_m = _cdiv(m, tm)
    m_pad = num_m * tm

    # --- Mode selection: weight-resident when the working set fits VMEM.
    x_panel_bytes = tm * k_pad * x_isz
    wt_bytes = k_pad * n_pad * w_isz
    out_panel_bytes = tm * n_pad * out_isz
    resident_need = (2 * (x_panel_bytes + wt_bytes + out_panel_bytes)
                     + tm * n_pad * 4          # f32 dot result / epilogue temp
                     + 2 * n_pad * 4)          # bias
    if max_resident_weight_bytes is None:
        max_resident_weight_bytes = vmem_cap // 4   # ~16 MiB v7x, ~32 MiB v5e/v6e
    resident_ok = (wt_bytes <= max_resident_weight_bytes
                   and resident_need <= (vmem_cap * 5) // 8)

    # --- Prepare x (skip pad/cast when already aligned).
    x2d = x.reshape(m, input_size)
    if x2d.dtype != cdt:
        x2d = x2d.astype(cdt)
    if (m_pad, k_pad) != (m, input_size):
        x2d = jnp.pad(x2d, ((0, m_pad - m), (0, k_pad - input_size)))

    use_bias = params.bias is not None

    if resident_ok:
        kernel = functools.partial(
            _ff_kernel_resident, activ=activ, use_bias=use_bias,
            gelu_approx=gelu_approx)
        in_specs = [
            pl.BlockSpec((tm, k_pad), lambda i: (i, 0)),      # x row-panel
            pl.BlockSpec((k_pad, n_pad), lambda i: (0, 0)),   # whole W^T, resident
        ]
        inputs = [x2d, params.wt]
        if use_bias:
            in_specs.append(pl.BlockSpec((1, n_pad), lambda i: (0, 0)))
            inputs.append(params.bias)
        out_spec = pl.BlockSpec((tm, n_pad), lambda i: (i, 0))
        grid = (num_m,)
        scratch = []
        dim_sem = ("parallel",)
        vmem_need = resident_need
    else:
        tn = _largest_divisor(n_pad, (tn_default, 512, 256, 128))
        tk = _largest_divisor(k_pad, (tk_default, 1024, 512, 256, 128))
        acc_in_out = (jnp.dtype(out_dtype) == jnp.dtype(jnp.float32))
        kernel = functools.partial(
            _ff_kernel_stream, activ=activ, use_bias=use_bias,
            acc_in_out=acc_in_out, gelu_approx=gelu_approx)
        in_specs = [
            pl.BlockSpec((tm, tk), lambda i, j, k: (i, k)),
            pl.BlockSpec((tk, tn), lambda i, j, k: (k, j)),
        ]
        inputs = [x2d, params.wt]
        if use_bias:
            in_specs.append(pl.BlockSpec((1, tn), lambda i, j, k: (0, j)))
            inputs.append(params.bias)
        out_spec = pl.BlockSpec((tm, tn), lambda i, j, k: (i, j))
        grid = (num_m, n_pad // tn, k_pad // tk)
        scratch = [] if acc_in_out else [pltpu.VMEM((tm, tn), jnp.float32)]
        dim_sem = ("parallel", "parallel", "arbitrary")
        vmem_need = (2 * (tm * tk * x_isz + tk * tn * w_isz
                          + tm * tn * out_isz + tn * 4)
                     + (0 if acc_in_out else tm * tn * 4))

    vmem_limit = int(min(max(vmem_need + vmem_need // 2, 16 << 20),
                         (vmem_cap * 5) // 8))

    cost = pl.CostEstimate(
        flops=2 * m_pad * k_pad * n_pad,
        transcendentals=(m_pad * n_pad if activ in _TRANSCENDENTAL_ACTIVS else 0),
        bytes_accessed=(m_pad * k_pad * x_isz + k_pad * n_pad * w_isz
                        + m_pad * n_pad * out_isz),
    )

    out2d = pl.pallas_call(
        kernel,
        out_shape=jax.ShapeDtypeStruct((m_pad, n_pad), out_dtype),
        grid_spec=pltpu.PrefetchScalarGridSpec(
            num_scalar_prefetch=0,
            grid=grid,
            in_specs=in_specs,
            out_specs=out_spec,
            scratch_shapes=scratch,
        ),
        compiler_params=pltpu.CompilerParams(
            dimension_semantics=dim_sem,
            vmem_limit_bytes=vmem_limit,
        ),
        cost_estimate=cost,
    )(*inputs)

    if (m_pad, n_pad) != (m, hidden_size):
        out2d = out2d[:m, :hidden_size]
    return out2d.reshape(*lead_shape, hidden_size)


# ----------------------------------------------------------------------------
# Parameter init matching FF.reset_parameters (deterministic, synthetic)
# ----------------------------------------------------------------------------
def init_ff_params(key, input_size, hidden_size, use_bias=True, bias_zero=True):
    stdv = 1.0 / math.sqrt(input_size)
    kw, kb = jax.random.split(key)
    weight = jax.random.uniform(
        kw, (hidden_size, input_size), jnp.float32, minval=-stdv, maxval=stdv
    )
    if not use_bias:
        return weight, None
    if bias_zero:
        bias = jnp.zeros((hidden_size,), jnp.float32)
    else:
        bias = jax.random.uniform(
            kb, (hidden_size,), jnp.float32, minval=-stdv, maxval=stdv
        )
    return weight, bias


# ----------------------------------------------------------------------------
if __name__ == "__main__":
    key = jax.random.PRNGKey(0)
    k_x, k_p = jax.random.split(key)

    batch, seq, input_size, hidden_size = 2, 8, 32, 64
    x = jax.random.normal(k_x, (batch, seq, input_size), jnp.float32)

    # 1) FF(32, 64, bias=True, bias_zero=False, activ='tanh'), bf16 compute path
    #    (weight-resident kernel).
    weight, bias = init_ff_params(
        k_p, input_size, hidden_size, use_bias=True, bias_zero=False
    )
    params_bf16 = prepare_ff_params(weight, bias)           # bf16 default
    out = jax.block_until_ready(ff_forward(x, params_bf16, activ="tanh"))
    x_bf = x.astype(jnp.bfloat16).astype(jnp.float32)
    w_bf = weight.astype(jnp.bfloat16).astype(jnp.float32)
    ref = jnp.tanh(jnp.einsum("bsk,nk->bsn", x_bf, w_bf,
                              precision=jax.lax.Precision.HIGHEST) + bias)
    assert out.shape == (batch, seq, hidden_size)
    assert jnp.allclose(out, ref, atol=5e-3, rtol=5e-3)

    # 2) FF(32, 64, bias=False, activ=None), explicit f32 compute path.
    weight2, _ = init_ff_params(k_p, input_size, hidden_size, use_bias=False)
    params_f32 = prepare_ff_params(weight2, None, compute_dtype=jnp.float32)
    out2 = jax.block_until_ready(ff_forward(x, params_f32, activ=None))
    ref2 = jnp.einsum("bsk,nk->bsn", x, weight2,
                      precision=jax.lax.Precision.HIGHEST)
    assert jnp.allclose(out2, ref2, atol=2e-3, rtol=2e-3)

    # 3) Exercise the streamed fallback kernel (force weight off-VMEM path).
    out3 = jax.block_until_ready(
        ff_forward(x, params_bf16, activ="relu", max_resident_weight_bytes=0))
    ref3 = jnp.maximum(
        jnp.einsum("bsk,nk->bsn", x_bf, w_bf,
                   precision=jax.lax.Precision.HIGHEST) + bias, 0.0)
    assert jnp.allclose(out3, ref3, atol=5e-3, rtol=5e-3)

    print("KERNEL_OK")
</pallas_src>

<mosaic_0001>
module attributes {stable_mosaic.version = 11 : i64} {
  func.func @_ff_kernel_resident(%arg0: i32, %arg1: memref<16x128xbf16, #tpu.memory_space<vmem>>, %arg2: memref<128x128xbf16, #tpu.memory_space<vmem>>, %arg3: memref<1x128xf32, #tpu.memory_space<vmem>>, %arg4: memref<16x128xf32, #tpu.memory_space<vmem>>) attributes {dimension_semantics = [#tpu.dimension_semantics<parallel>], iteration_bounds = array<i64: 1>, scalar_prefetch = 0 : i64, scratch_operands = 0 : i64, tpu.core_type = #tpu.core_type<tc>, window_params = [{transform_indices = @transform_0, window_bounds = array<i64: 16, 128>}, {pipeline_mode = #tpu.pipeline_mode<synchronous>, transform_indices = @transform_1, window_bounds = array<i64: 128, 128>}, {pipeline_mode = #tpu.pipeline_mode<synchronous>, transform_indices = @transform_2, window_bounds = array<i64: 1, 128>}, {transform_indices = @transform_3, window_bounds = array<i64: 16, 128>}]} {
    %c0 = arith.constant 0 : index
    %c0_0 = arith.constant 0 : index
    %0 = vector.load %arg1[%c0, %c0_0] : memref<16x128xbf16, #tpu.memory_space<vmem>>, vector<16x128xbf16>
    %c0_1 = arith.constant 0 : index
    %c0_2 = arith.constant 0 : index
    %1 = vector.load %arg2[%c0_1, %c0_2] : memref<128x128xbf16, #tpu.memory_space<vmem>>, vector<128x128xbf16>
    %cst = arith.constant dense<0.000000e+00> : vector<16x128xf32>
    %2 = tpu.matmul %0, %1, %cst {dimension_numbers = #tpu.dot_dimension_numbers<[1], [0], [0], [1], [0, 0, 1, 1], [], []>} : vector<16x128xbf16>, vector<128x128xbf16>, vector<16x128xf32> -> vector<16x128xf32>
    %c0_3 = arith.constant 0 : index
    %c0_4 = arith.constant 0 : index
    %3 = vector.load %arg3[%c0_3, %c0_4] : memref<1x128xf32, #tpu.memory_space<vmem>>, vector<1x128xf32>
    %4 = vector.broadcast %3 : vector<1x128xf32> to vector<16x128xf32>
    %5 = arith.addf %2, %4 : vector<16x128xf32>
    %6 = math.tanh %5 : vector<16x128xf32>
    %c0_5 = arith.constant 0 : index
    %c0_6 = arith.constant 0 : index
    %7 = vector.load %arg4[%c0_5, %c0_6] : memref<16x128xf32, #tpu.memory_space<vmem>>, vector<16x128xf32>
    tpu.vector_store %arg4[%c0_5, %c0_6], %6 {strides = array<i32>} : memref<16x128xf32, #tpu.memory_space<vmem>>, vector<16x128xf32>,
    return
  }
  func.func @transform_0(%arg0: i32) -> (i32, i32) {
    %c0_i32 = arith.constant 0 : i32
    %c0_i32_0 = arith.constant 0 : i32
    return %arg0, %c0_i32 : i32, i32
  }
  func.func @transform_1(%arg0: i32) -> (i32, i32) {
    %c0_i32 = arith.constant 0 : i32
    %c0_i32_0 = arith.constant 0 : i32
    %c0_i32_1 = arith.constant 0 : i32
    return %c0_i32, %c0_i32_0 : i32, i32
  }
  func.func @transform_2(%arg0: i32) -> (i32, i32) {
    %c0_i32 = arith.constant 0 : i32
    %c0_i32_0 = arith.constant 0 : i32
    %c0_i32_1 = arith.constant 0 : i32
    return %c0_i32, %c0_i32_0 : i32, i32
  }
  func.func @transform_3(%arg0: i32) -> (i32, i32) {
    %c0_i32 = arith.constant 0 : i32
    %c0_i32_0 = arith.constant 0 : i32
    return %arg0, %c0_i32 : i32, i32
  }
}

</mosaic_0001>

<llo_original>
// kernel: tpu_custom_call.1
$region0: #{tpu_custom_call.1}
  #allocation0 [shape = 'u32[]', space=smem, size = 0x4, offset = 0x4, fixed_abs, tag = 'smem constant byte address 0x4 - core index']
  #allocation1 [shape = 'u32[144,128]{1,0:T(1,128)}', space=vmem, size = 0x12000, scoped, tag = 'internal scratch']
  %s0 = inlined_call_operand.hbm [shape: bf16[16,128], index: 0, kind: input, shape index: {}]
  %s1 = inlined_call_operand.hbm [shape: bf16[128,128], index: 1, kind: input, shape index: {}]
  %s2 = inlined_call_operand.vmem [shape: f32[1,128], index: 2, kind: input, shape index: {}]
  %s3 = inlined_call_operand.hbm [shape: f32[16,128], index: 3, kind: output, shape index: {}]
  %s4 = sld [smem:[#allocation0]]
  $region30: #{tpu_custom_call.1} parent=0
    _
  %s6 = ssub.s32 1, %s4
  %s7 = scalar_select 0, %s6, %s4
  $region1: #{tpu_custom_call.1} parent=0
    #allocation2 [shape = 'u8[4096]{0}', space=vmem, size = 0x1000, scoped, tag = 'input window, operand 0, single buffered']
    #allocation3 [shape = 's32[1]{0}', space=sflag, size = 0x4, scoped, tag = 'scoped memory for tpu_custom_call.1']
    #allocation4 [shape = 's32[1]{0}', space=sflag, size = 0x4, scoped, tag = 'scoped memory for tpu_custom_call.1']
    #allocation5 [shape = 'u8[32768]{0}', space=vmem, size = 0x8000, scoped, tag = 'input window, operand 1, single buffered']
    #allocation6 [shape = 's32[1]{0}', space=sflag, size = 0x4, scoped, tag = 'scoped memory for tpu_custom_call.1']
    #allocation7 [shape = 'u8[8192]{0}', space=vmem, size = 0x2000, scoped, tag = 'output window, operand 0, single buffered']
    %8 = vsyncpa [#allocation3], 0
    %9 = vsyncpa [#allocation6], 0
    %10 = vsyncpa [#allocation4], 0
    // Predicated region
    $region2: #{tpu_custom_call.1} parent=1 // pred_check
      _
    $region3: #{tpu_custom_call.1} parent=1 // pred_check_branch
      %12 = sbr.rel (0) target = $region5
    $region4: #{tpu_custom_call.1} parent=1 // pred_region
      %s14 = ssub.s32 128, 128
      %15 = vsyncadd [#allocation3], %s14
      %s16 = sshll.u32 [#allocation2], 4
      %s17 = int_to_ptr.vmem [resolvable:$true] %s16
      %22 = dma.hbm_to_vmem [thread:$0]  %s0, 128, %s17, [#allocation3], 64, 64, 4
    $region5: #{tpu_custom_call.1} parent=1 // pred_fallthru
      _
    // Predicated region
    $region6: #{tpu_custom_call.1} parent=1 // pred_check
      _
    $region7: #{tpu_custom_call.1} parent=1 // pred_check_branch
      %24 = sbr.rel (0) target = $region9
    $region8: #{tpu_custom_call.1} parent=1 // pred_region
      %s26 = ssub.s32 1024, 1024
      %27 = vsyncadd [#allocation6], %s26
      %s28 = sshll.u32 [#allocation5], 4
      %s29 = int_to_ptr.vmem [resolvable:$true] %s28
      %34 = dma.hbm_to_vmem [thread:$0]  %s1, 1024, %s29, [#allocation6], 64, 64, 4
    $region9: #{tpu_custom_call.1} parent=1 // pred_fallthru
      _
    // Predicated region
    $region10: #{tpu_custom_call.1} parent=1 // pred_check
      _
    $region11: #{tpu_custom_call.1} parent=1 // pred_check_branch
      %36 = sbr.rel (0) target = $region13
    $region12: #{tpu_custom_call.1} parent=1 // pred_region
      _
    $region13: #{tpu_custom_call.1} parent=1 // pred_fallthru
      _
    // Predicated region
    $region14: #{tpu_custom_call.1} parent=1 // pred_check
      _
    $region15: #{tpu_custom_call.1} parent=1 // pred_check_branch
      %38 = sbr.rel (0) target = $region17
    $region16: #{tpu_custom_call.1} parent=1 // pred_region
      %39 = dma.done [#allocation3], 128
    $region17: #{tpu_custom_call.1} parent=1 // pred_fallthru
      _
    // Predicated region
    $region18: #{tpu_custom_call.1} parent=1 // pred_check
      _
    $region19: #{tpu_custom_call.1} parent=1 // pred_check_branch
      %41 = sbr.rel (0) target = $region21
    $region20: #{tpu_custom_call.1} parent=1 // pred_region
      %42 = dma.done [#allocation6], 1024
    $region21: #{tpu_custom_call.1} parent=1 // pred_fallthru
      _
    %v44 = vld [vmem:[#allocation2] sm:$0xf]
    %v45 = vld [vmem:[#allocation2 + $0x4] sm:$0xf]
    %v46 = vld [vmem:[#allocation5] sm:$0xf]
    %v47 = vld [vmem:[#allocation5 + $0x4] sm:$0xf]
    %v48 = vld [vmem:[#allocation5 + $0x8] sm:$0xf]
    %v49 = vld [vmem:[#allocation5 + $0xc] sm:$0xf]
    %v50 = vld [vmem:[#allocation5 + $0x10] sm:$0xf]
    %v51 = vld [vmem:[#allocation5 + $0x14] sm:$0xf]
    %v52 = vld [vmem:[#allocation5 + $0x18] sm:$0xf]
    %v53 = vld [vmem:[#allocation5 + $0x1c] sm:$0xf]
    %v54 = vld [vmem:[#allocation5 + $0x20] sm:$0xf]
    %v55 = vld [vmem:[#allocation5 + $0x24] sm:$0xf]
    %v56 = vld [vmem:[#allocation5 + $0x28] sm:$0xf]
    %v57 = vld [vmem:[#allocation5 + $0x2c] sm:$0xf]
    %v58 = vld [vmem:[#allocation5 + $0x30] sm:$0xf]
    %v59 = vld [vmem:[#allocation5 + $0x34] sm:$0xf]
    %v60 = vld [vmem:[#allocation5 + $0x38] sm:$0xf]
    %v61 = vld [vmem:[#allocation5 + $0x3c] sm:$0xf]
    %v62 = vld [vmem:[%s2] sm:$0x1]
    %v64 = vlaneseq
    %v65 = vshrl.u32 %v64, 7
    %v66 = vsub.s32 0, %v65
    %v67 = vrot.slane %v62, %v66
    %v71 = vunpack.c.l.b16 %v44
    %v72 = vunpack.c.l.b16 %v45
    %v73 = vpack.c.b16 %v72, %v71
    %v91 = vunpack.c.l.b16 %v46
    %v92 = vunpack.c.l.b16 %v47
    %v93 = vunpack.c.l.b16 %v48
    %v94 = vunpack.c.l.b16 %v49
    %v95 = vunpack.c.l.b16 %v50
    %v96 = vunpack.c.l.b16 %v51
    %v97 = vunpack.c.l.b16 %v52
    %v98 = vunpack.c.l.b16 %v53
    %v99 = vunpack.c.l.b16 %v54
    %v100 = vunpack.c.l.b16 %v55
    %v101 = vunpack.c.l.b16 %v56
    %v102 = vunpack.c.l.b16 %v57
    %v103 = vunpack.c.l.b16 %v58
    %v104 = vunpack.c.l.b16 %v59
    %v105 = vunpack.c.l.b16 %v60
    %v106 = vunpack.c.l.b16 %v61
    %v107 = vpack.c.b16 %v92, %v91
    %v108 = vpack.c.b16 %v94, %v93
    %v109 = vpack.c.b16 %v96, %v95
    %v110 = vpack.c.b16 %v98, %v97
    %v111 = vpack.c.b16 %v100, %v99
    %v112 = vpack.c.b16 %v102, %v101
    %v113 = vpack.c.b16 %v104, %v103
    %v114 = vpack.c.b16 %v106, %v105
    %123 = vmatprep.subr.bf16.mxu0 0
    %124 = vmatpush1.bf16.msra.mxu0 %v107
    %125 = vmatprep.subr.bf16.mxu0 0
    %126 = vmatpush1.bf16.msra.mxu0 %v108
    %127 = vmatprep.subr.bf16.mxu0 0
    %128 = vmatpush1.bf16.msra.mxu0 %v109
    %129 = vmatprep.subr.bf16.mxu0 0
    %130 = vmatpush1.bf16.msra.mxu0 %v110
    %131 = vmatprep.subr.bf16.mxu0 0
    %132 = vmatpush1.bf16.msra.mxu0 %v111
    %133 = vmatprep.subr.bf16.mxu0 0
    %134 = vmatpush1.bf16.msra.mxu0 %v112
    %135 = vmatprep.subr.bf16.mxu0 0
    %136 = vmatpush1.bf16.msra.mxu0 %v113
    %137 = vmatprep.subr.bf16.mxu0 0
    %138 = vmatpush1.bf16.msra.mxu0 %v114
    %139 = vmatprep.subr.bf16.mxu0 0
    %140 = vmatpush1.bf16.msra.mxu0 0
    %141 = vmatprep.subr.bf16.mxu0 0
    %142 = vmatpush1.bf16.msra.mxu0 0
    %143 = vmatprep.subr.bf16.mxu0 0
    %144 = vmatpush1.bf16.msra.mxu0 0
    %145 = vmatprep.subr.bf16.mxu0 0
    %146 = vmatpush1.bf16.msra.mxu0 0
    %147 = vmatprep.subr.bf16.mxu0 0
    %148 = vmatpush1.bf16.msra.mxu0 0
    %149 = vmatprep.subr.bf16.mxu0 0
    %150 = vmatpush1.bf16.msra.mxu0 0
    %151 = vmatprep.subr.bf16.mxu0 0
    %152 = vmatpush1.bf16.msra.mxu0 0
    %153 = vmatprep.subr.bf16.mxu0 0
    %154 = vmatpush1.bf16.msra.mxu0 0
    %155 = vmatprep.mubr.bf16.mxu0 0
    %156 = vmatmul.mubr.bf16.gmra.mrb[0].mxu0 %v73
    %v157 = vpop.f32.mrb[0].mxu0
    %v158 = vadd.f32 %v67, %v157
    %v159 = vpop.f32.mrb[0].mxu0
    %v160 = vpop.f32.mrb[0].mxu0
    %v161 = vadd.f32 %v67, %v160
    %v162 = vpop.f32.mrb[0].mxu0
    %163 = vdwg.mxu0
    %v164 = vtanh.pop %v158
    %v165 = vtanh.pop %v161
    %166 = vst [vmem:[#allocation7] sm:$0xff] %v164
    %167 = vst [vmem:[#allocation7 + $0x8] sm:$0xff] %v165
    // Predicated region
    $region22: #{tpu_custom_call.1} parent=1 // pred_check
      _
    $region23: #{tpu_custom_call.1} parent=1 // pred_check_branch
      %169 = sbr.rel (0) target = $region25
    $region24: #{tpu_custom_call.1} parent=1 // pred_region
      %s171 = ssub.s32 256, 256
      %172 = vsyncadd [#allocation4], %s171
      %s173 = sshll.u32 [#allocation7], 4
      %s174 = int_to_ptr.vmem [resolvable:$true] %s173
      %179 = dma.vmem_to_hbm [thread:$0]  %s174, 256, %s3, [#allocation4], 128, 128, 8
    $region25: #{tpu_custom_call.1} parent=1 // pred_fallthru
      _
    // Predicated region
    $region26: #{tpu_custom_call.1} parent=1 // pred_check
      _
    $region27: #{tpu_custom_call.1} parent=1 // pred_check_branch
      %181 = sbr.rel (0) target = $region29
    $region28: #{tpu_custom_call.1} parent=1 // pred_region
      %182 = dma.done [#allocation4], 256
    $region29: #{tpu_custom_call.1} parent=1 // pred_fallthru
      _
    %183 = vsyncpa [#allocation3], 1
    %184 = vsyncpa [#allocation6], 1
    %185 = vsyncpa [#allocation4], 1

</llo_original>
